<compile_context>
chip_gen: v5e
topology: v5e:2x2
jax: 0.10.0
libtpu: 0.0.40
codegen_flags: <defaults>
</compile_context>

<pallas_src>
import functools

import jax
import jax.numpy as jnp
from jax.experimental import pallas as pl
from jax.experimental.pallas import tpu as pltpu


def _crossnet_kernel(x_ref, w_ref, b_ref, o_ref, *, layer_num):
    # x_ref: (TB, D) input tile; w_ref/b_ref: full (L, D); o_ref: (TB, D)
    x0 = x_ref[...].astype(jnp.float32)
    xl = x0
    # layer_num is small & static -> unrolled Python loop; hot math on VPU/XLU.
    for i in range(layer_num):
        w = w_ref[i, :].astype(jnp.float32)            # (D,)
        b = b_ref[i, :].astype(jnp.float32)            # (D,)
        # tensordot(x_l, kernels[i], dims=[[1],[0]]) -> per-row scalar.
        # TODO(synk): for very large D / deep stacks in f32 this lane-reduce
        # could be offloaded to the MXU (jnp.dot(xl, w[:, None])); only pays
        # off once the kernel stops being HBM-bound.
        s = jnp.sum(xl * w[None, :], axis=-1, keepdims=True)   # (TB, 1)
        # matmul(x_0, xl_w) broadcasts the per-row scalar over features.
        xl = x0 * s + b[None, :] + xl
    o_ref[...] = xl.astype(o_ref.dtype)


def crossnet_forward(x, kernels, bias, *, block_b=None, vmem_limit_bytes=None):
    """x: (B, D); kernels, bias: (L, D). Returns (B, D) in x.dtype."""
    B, D = x.shape
    L, Dk = kernels.shape
    assert Dk == D and bias.shape == (L, D)

    x_isz = jnp.dtype(x.dtype).itemsize
    out_dtype = x.dtype
    o_isz = jnp.dtype(out_dtype).itemsize
    w_isz = jnp.dtype(kernels.dtype).itemsize
    b_isz = jnp.dtype(bias.dtype).itemsize

    # Sublane alignment for the batch-tile dim: 8 rows (f32), 16 (bf16), ...
    row_align = max(8, 32 // x_isz)

    # Resident weight/bias footprint (pipeline double-buffers them too).
    weight_bytes = 2 * L * D * (w_isz + b_isz)

    if block_b is None:
        # Size the batch tile from a VMEM budget that also fits v7x (64 MiB/TC):
        # 2 input buffers + 2 output buffers per tile, ~24 MiB target, <=2048 rows.
        tile_budget = 24 << 20
        per_row = 2 * D * (x_isz + o_isz)
        max_rows = max((tile_budget - weight_bytes) // per_row, row_align)
        block_b = int(min(2048, max_rows))

    # Align the tile and never exceed the (aligned-up) batch.
    block_b = max(row_align, (int(block_b) // row_align) * row_align)
    block_b = min(block_b, row_align * pl.cdiv(B, row_align))

    # v7x megacore: prefer >= 2 grid steps so the "parallel" axis can shard
    # across both TensorCores (neutral on single-TC v5e/v6e).
    if pl.cdiv(B, block_b) < 2 and B > row_align:
        block_b = row_align * pl.cdiv(pl.cdiv(B, 2), row_align)

    num_tiles = pl.cdiv(B, block_b)
    b_pad = num_tiles * block_b
    if b_pad != B:
        # Ragged batch: zero-pad and slice the result (cheaper than a masked
        # final-tile store for a mem-bound elementwise kernel).
        x = jnp.pad(x, ((0, b_pad - B), (0, 0)))

    if vmem_limit_bytes is None:
        footprint = 2 * block_b * D * (x_isz + o_isz) + weight_bytes
        vmem_limit_bytes = int(max(32 << 20, footprint + footprint // 2))

    # TODO(synk): for production D < 128 (narrow feature dim), a lane-dense
    # transposed layout (batch on lanes) avoids masked vst; with D equal to
    # the full array dim (as here) the current layout is valid and simple.

    kernel = functools.partial(_crossnet_kernel, layer_num=L)

    out = pl.pallas_call(
        kernel,
        out_shape=jax.ShapeDtypeStruct((b_pad, D), out_dtype),
        grid_spec=pltpu.PrefetchScalarGridSpec(
            num_scalar_prefetch=0,
            grid=(num_tiles,),
            in_specs=[
                pl.BlockSpec((block_b, D), lambda i: (i, 0)),   # x batch tile
                pl.BlockSpec((L, D), lambda i: (0, 0)),         # weights (resident)
                pl.BlockSpec((L, D), lambda i: (0, 0)),         # biases  (resident)
            ],
            out_specs=pl.BlockSpec((block_b, D), lambda i: (i, 0)),
        ),
        compiler_params=pltpu.CompilerParams(
            dimension_semantics=("parallel",),
            vmem_limit_bytes=vmem_limit_bytes,
        ),
    )(x, kernels, bias)

    return out[:B] if b_pad != B else out


def crossnet_reference(x, kernels, bias):
    """Pure-JAX reference mirroring the PyTorch forward exactly."""
    x0 = x[:, :, None]                                   # (B, D, 1)
    xl = x0
    for i in range(kernels.shape[0]):
        w = kernels[i][:, None]                          # (D, 1)
        xl_w = jnp.tensordot(xl, w, axes=[[1], [0]])     # (B, 1, 1)
        dot_ = jnp.matmul(x0, xl_w)                      # (B, D, 1)
        xl = dot_ + bias[i][:, None] + xl
    return jnp.squeeze(xl, axis=2)


if __name__ == "__main__":
    D, L = 32, 2
    key = jax.random.PRNGKey(0)
    kx, kw, kx2 = jax.random.split(key, 3)

    # Deterministic parameter init matching nn.init.xavier_normal_ on (D, 1):
    # std = sqrt(2 / (fan_in + fan_out)) = sqrt(2 / (D + 1)); bias = zeros.
    xavier_std = (2.0 / (D + 1)) ** 0.5
    kernels = jax.random.normal(kw, (L, D), dtype=jnp.float32) * xavier_std
    bias = jnp.zeros((L, D), dtype=jnp.float32)

    # Case 1: small, tile-aligned batch (single grid step).
    B1 = 8
    x1 = jax.random.normal(kx, (B1, D), dtype=jnp.float32)
    out1 = jax.block_until_ready(crossnet_forward(x1, kernels, bias))
    ref1 = crossnet_reference(x1, kernels, bias)
    assert out1.shape == (B1, D)
    assert jnp.allclose(out1, ref1, atol=1e-5, rtol=1e-5), "mismatch (case 1)"

    # Case 2: ragged batch, exercises padding + multi-tile grid.
    B2 = 20
    x2 = jax.random.normal(kx2, (B2, D), dtype=jnp.float32)
    out2 = jax.block_until_ready(crossnet_forward(x2, kernels, bias))
    ref2 = crossnet_reference(x2, kernels, bias)
    assert out2.shape == (B2, D)
    assert jnp.allclose(out2, ref2, atol=1e-5, rtol=1e-5), "mismatch (case 2)"

    print("KERNEL_OK")
</pallas_src>

<mosaic_0001>
module attributes {stable_mosaic.version = 11 : i64} {
  func.func @_crossnet_kernel(%arg0: i32, %arg1: memref<8x32xf32, #tpu.memory_space<vmem>>, %arg2: memref<2x32xf32, #tpu.memory_space<vmem>>, %arg3: memref<2x32xf32, #tpu.memory_space<vmem>>, %arg4: memref<8x32xf32, #tpu.memory_space<vmem>>) attributes {dimension_semantics = [#tpu.dimension_semantics<parallel>], iteration_bounds = array<i64: 1>, scalar_prefetch = 0 : i64, scratch_operands = 0 : i64, tpu.core_type = #tpu.core_type<tc>, window_params = [{transform_indices = @transform_0, window_bounds = array<i64: 8, 32>}, {pipeline_mode = #tpu.pipeline_mode<synchronous>, transform_indices = @transform_1, window_bounds = array<i64: 2, 32>}, {pipeline_mode = #tpu.pipeline_mode<synchronous>, transform_indices = @transform_2, window_bounds = array<i64: 2, 32>}, {transform_indices = @transform_3, window_bounds = array<i64: 8, 32>}]} {
    %c0 = arith.constant 0 : index
    %c0_0 = arith.constant 0 : index
    %0 = vector.load %arg1[%c0, %c0_0] : memref<8x32xf32, #tpu.memory_space<vmem>>, vector<8x32xf32>
    %c0_1 = arith.constant 0 : index
    %c0_2 = arith.constant 0 : index
    %1 = vector.load %arg2[%c0_1, %c0_2] : memref<2x32xf32, #tpu.memory_space<vmem>>, vector<1x32xf32>
    %2 = vector.shape_cast %1 : vector<1x32xf32> to vector<32xf32>
    %c0_3 = arith.constant 0 : index
    %c0_4 = arith.constant 0 : index
    %3 = vector.load %arg3[%c0_3, %c0_4] : memref<2x32xf32, #tpu.memory_space<vmem>>, vector<1x32xf32>
    %4 = vector.shape_cast %3 : vector<1x32xf32> to vector<32xf32>
    %5 = vector.shape_cast %2 : vector<32xf32> to vector<1x32xf32>
    %6 = vector.broadcast %5 : vector<1x32xf32> to vector<8x32xf32>
    %7 = arith.mulf %0, %6 : vector<8x32xf32>
    %cst = arith.constant dense<0.000000e+00> : vector<8xf32>
    %8 = vector.multi_reduction <add>, %7, %cst [1] : vector<8x32xf32> to vector<8xf32>
    %9 = vector.shape_cast %8 : vector<8xf32> to vector<8x1xf32>
    %10 = vector.broadcast %9 : vector<8x1xf32> to vector<8x32xf32>
    %11 = arith.mulf %0, %10 : vector<8x32xf32>
    %12 = vector.shape_cast %4 : vector<32xf32> to vector<1x32xf32>
    %13 = vector.broadcast %12 : vector<1x32xf32> to vector<8x32xf32>
    %14 = arith.addf %11, %13 : vector<8x32xf32>
    %15 = arith.addf %14, %0 : vector<8x32xf32>
    %c1 = arith.constant 1 : index
    %c0_5 = arith.constant 0 : index
    %16 = vector.load %arg2[%c1, %c0_5] : memref<2x32xf32, #tpu.memory_space<vmem>>, vector<1x32xf32>
    %17 = vector.shape_cast %16 : vector<1x32xf32> to vector<32xf32>
    %c1_6 = arith.constant 1 : index
    %c0_7 = arith.constant 0 : index
    %18 = vector.load %arg3[%c1_6, %c0_7] : memref<2x32xf32, #tpu.memory_space<vmem>>, vector<1x32xf32>
    %19 = vector.shape_cast %18 : vector<1x32xf32> to vector<32xf32>
    %20 = vector.shape_cast %17 : vector<32xf32> to vector<1x32xf32>
    %21 = vector.broadcast %20 : vector<1x32xf32> to vector<8x32xf32>
    %22 = arith.mulf %15, %21 : vector<8x32xf32>
    %cst_8 = arith.constant dense<0.000000e+00> : vector<8xf32>
    %23 = vector.multi_reduction <add>, %22, %cst_8 [1] : vector<8x32xf32> to vector<8xf32>
    %24 = vector.shape_cast %23 : vector<8xf32> to vector<8x1xf32>
    %25 = vector.broadcast %24 : vector<8x1xf32> to vector<8x32xf32>
    %26 = arith.mulf %0, %25 : vector<8x32xf32>
    %27 = vector.shape_cast %19 : vector<32xf32> to vector<1x32xf32>
    %28 = vector.broadcast %27 : vector<1x32xf32> to vector<8x32xf32>
    %29 = arith.addf %26, %28 : vector<8x32xf32>
    %30 = arith.addf %29, %15 : vector<8x32xf32>
    %c0_9 = arith.constant 0 : index
    %c0_10 = arith.constant 0 : index
    %31 = vector.load %arg4[%c0_9, %c0_10] : memref<8x32xf32, #tpu.memory_space<vmem>>, vector<8x32xf32>
    tpu.vector_store %arg4[%c0_9, %c0_10], %30 {strides = array<i32>} : memref<8x32xf32, #tpu.memory_space<vmem>>, vector<8x32xf32>,
    return
  }
  func.func @transform_0(%arg0: i32) -> (i32, i32) {
    %c0_i32 = arith.constant 0 : i32
    %c0_i32_0 = arith.constant 0 : i32
    return %arg0, %c0_i32 : i32, i32
  }
  func.func @transform_1(%arg0: i32) -> (i32, i32) {
    %c0_i32 = arith.constant 0 : i32
    %c0_i32_0 = arith.constant 0 : i32
    %c0_i32_1 = arith.constant 0 : i32
    return %c0_i32, %c0_i32_0 : i32, i32
  }
  func.func @transform_2(%arg0: i32) -> (i32, i32) {
    %c0_i32 = arith.constant 0 : i32
    %c0_i32_0 = arith.constant 0 : i32
    %c0_i32_1 = arith.constant 0 : i32
    return %c0_i32, %c0_i32_0 : i32, i32
  }
  func.func @transform_3(%arg0: i32) -> (i32, i32) {
    %c0_i32 = arith.constant 0 : i32
    %c0_i32_0 = arith.constant 0 : i32
    return %arg0, %c0_i32 : i32, i32
  }
}

</mosaic_0001>

<llo_original>
// kernel: tpu_custom_call.1
$region0: #{tpu_custom_call.1}
  #allocation0 [shape = 'u32[]', space=smem, size = 0x4, offset = 0x4, fixed_abs, tag = 'smem constant byte address 0x4 - core index']
  #allocation1 [shape = 'u32[72,128]{1,0:T(1,128)}', space=vmem, size = 0x9000, scoped, tag = 'internal scratch']
  %s0 = inlined_call_operand.hbm [shape: f32[8,32], index: 0, kind: input, shape index: {}]
  %s1 = inlined_call_operand.hbm [shape: f32[2,32], index: 1, kind: input, shape index: {}]
  %s2 = inlined_call_operand.hbm [shape: f32[2,32], index: 2, kind: input, shape index: {}]
  %s3 = inlined_call_operand.hbm [shape: f32[8,32], index: 3, kind: output, shape index: {}]
  %s4 = sld [smem:[#allocation0]]
  $region34: #{tpu_custom_call.1} parent=0
    _
  %s6 = ssub.s32 1, %s4
  %s7 = scalar_select 0, %s6, %s4
  $region1: #{tpu_custom_call.1} parent=0
    #allocation2 [shape = 'u8[4096]{0}', space=vmem, size = 0x1000, scoped, tag = 'input window, operand 0, single buffered']
    #allocation3 [shape = 's32[1]{0}', space=sflag, size = 0x4, scoped, tag = 'scoped memory for tpu_custom_call.1']
    #allocation4 [shape = 's32[1]{0}', space=sflag, size = 0x4, scoped, tag = 'scoped memory for tpu_custom_call.1']
    #allocation5 [shape = 'u8[1024]{0}', space=vmem, size = 0x400, scoped, tag = 'input window, operand 1, single buffered']
    #allocation6 [shape = 's32[1]{0}', space=sflag, size = 0x4, scoped, tag = 'scoped memory for tpu_custom_call.1']
    #allocation7 [shape = 'u8[1024]{0}', space=vmem, size = 0x400, scoped, tag = 'input window, operand 2, single buffered']
    #allocation8 [shape = 'u8[4096]{0}', space=vmem, size = 0x1000, scoped, tag = 'output window, operand 0, single buffered']
    %8 = vsyncpa [#allocation3], 0
    %9 = vsyncpa [#allocation6], 0
    %10 = vsyncpa [#allocation4], 0
    // Predicated region
    $region2: #{tpu_custom_call.1} parent=1 // pred_check
      _
    $region3: #{tpu_custom_call.1} parent=1 // pred_check_branch
      %12 = sbr.rel (0) target = $region5
    $region4: #{tpu_custom_call.1} parent=1 // pred_region
      %14 = vsyncadd [#allocation3], 0
      %s16 = sshll.u32 %s0, 4
      %s17 = int_to_ptr.hbm [resolvable:$true] %s16
      %s18 = sshll.u32 [#allocation2], 4
      %s19 = int_to_ptr.vmem [resolvable:$true] %s18
      %21 = dma.hbm_to_vmem [thread:$0]  %s17, 128, %s19, [#allocation3]
    $region5: #{tpu_custom_call.1} parent=1 // pred_fallthru
      _
    // Predicated region
    $region6: #{tpu_custom_call.1} parent=1 // pred_check
      _
    $region7: #{tpu_custom_call.1} parent=1 // pred_check_branch
      %23 = sbr.rel (0) target = $region9
    $region8: #{tpu_custom_call.1} parent=1 // pred_region
      %25 = vsyncadd [#allocation6], 0
      %s27 = sshll.u32 %s1, 4
      %s28 = int_to_ptr.hbm [resolvable:$true] %s27
      %s29 = sshll.u32 [#allocation5], 4
      %s30 = int_to_ptr.vmem [resolvable:$true] %s29
      %32 = dma.hbm_to_vmem [thread:$0]  %s28, 32, %s30, [#allocation6]
    $region9: #{tpu_custom_call.1} parent=1 // pred_fallthru
      _
    // Predicated region
    $region10: #{tpu_custom_call.1} parent=1 // pred_check
      _
    $region11: #{tpu_custom_call.1} parent=1 // pred_check_branch
      %34 = sbr.rel (0) target = $region13
    $region12: #{tpu_custom_call.1} parent=1 // pred_region
      %36 = vsyncadd [#allocation6], 0
      %s38 = sshll.u32 %s2, 4
      %s39 = int_to_ptr.hbm [resolvable:$true] %s38
      %s40 = sshll.u32 [#allocation7], 4
      %s41 = int_to_ptr.vmem [resolvable:$true] %s40
      %43 = dma.hbm_to_vmem [thread:$0]  %s39, 32, %s41, [#allocation6]
    $region13: #{tpu_custom_call.1} parent=1 // pred_fallthru
      _
    // Predicated region
    $region14: #{tpu_custom_call.1} parent=1 // pred_check
      _
    $region15: #{tpu_custom_call.1} parent=1 // pred_check_branch
      %45 = sbr.rel (0) target = $region17
    $region16: #{tpu_custom_call.1} parent=1 // pred_region
      %47 = dma.done [#allocation3], 128
    $region17: #{tpu_custom_call.1} parent=1 // pred_fallthru
      _
    // Predicated region
    $region18: #{tpu_custom_call.1} parent=1 // pred_check
      _
    $region19: #{tpu_custom_call.1} parent=1 // pred_check_branch
      %49 = sbr.rel (0) target = $region21
    $region20: #{tpu_custom_call.1} parent=1 // pred_region
      %51 = dma.done [#allocation6], 32
    $region21: #{tpu_custom_call.1} parent=1 // pred_fallthru
      _
    // Predicated region
    $region22: #{tpu_custom_call.1} parent=1 // pred_check
      _
    $region23: #{tpu_custom_call.1} parent=1 // pred_check_branch
      %53 = sbr.rel (0) target = $region25
    $region24: #{tpu_custom_call.1} parent=1 // pred_region
      %55 = dma.done [#allocation6], 32
    $region25: #{tpu_custom_call.1} parent=1 // pred_fallthru
      _
    %v56 = vld [vmem:[#allocation2] sm:$0xff]
    %v57 = vld [vmem:[#allocation5] sm:$0x1]
    %v58 = vld [vmem:[#allocation7] sm:$0x1]
    %v59 = vperm.slane %v57, 0
    %v60 = vmul.f32 %v56, %v59
    %vm61 = vcmask 261120
    %v62 = vsel %vm61, %v60, 0.0
    %63 = vadd.xlane.f32.xlu0 %v62
    %v64 = vpop.xlane.xlu0 %63
    %v65 = vmul.f32 %v56, %v64
    %v66 = vperm.slane %v58, 0
    %v67 = vadd.f32 %v65, %v66
    %v68 = vadd.f32 %v67, %v56
    %v69 = vld [vmem:[#allocation5 + $0x1] sm:$0x1]
    %v70 = vld [vmem:[#allocation7 + $0x1] sm:$0x1]
    %v71 = vperm.slane %v69, 0
    %v72 = vmul.f32 %v68, %v71
    %v73 = vsel %vm61, %v72, 0.0
    %74 = vadd.xlane.f32.xlu0 %v73
    %v75 = vpop.xlane.xlu0 %74
    %v76 = vmul.f32 %v56, %v75
    %v77 = vperm.slane %v70, 0
    %v78 = vadd.f32 %v76, %v77
    %v79 = vadd.f32 %v78, %v68
    %80 = vst.msk [vmem:[#allocation8] sm:$0xff] %vm61, %v79
    // Predicated region
    $region26: #{tpu_custom_call.1} parent=1 // pred_check
      _
    $region27: #{tpu_custom_call.1} parent=1 // pred_check_branch
      %82 = sbr.rel (0) target = $region29
    $region28: #{tpu_custom_call.1} parent=1 // pred_region
      %84 = vsyncadd [#allocation4], 0
      %s86 = sshll.u32 [#allocation8], 4
      %s87 = int_to_ptr.vmem [resolvable:$true] %s86
      %s88 = sshll.u32 %s3, 4
      %s89 = int_to_ptr.hbm [resolvable:$true] %s88
      %91 = dma.vmem_to_hbm [thread:$0]  %s87, 128, %s89, [#allocation4]
    $region29: #{tpu_custom_call.1} parent=1 // pred_fallthru
      _
    // Predicated region
    $region30: #{tpu_custom_call.1} parent=1 // pred_check
      _
    $region31: #{tpu_custom_call.1} parent=1 // pred_check_branch
      %93 = sbr.rel (0) target = $region33
    $region32: #{tpu_custom_call.1} parent=1 // pred_region
      %95 = dma.done [#allocation4], 128
    $region33: #{tpu_custom_call.1} parent=1 // pred_fallthru
      _
    %96 = vsyncpa [#allocation3], 1
    %97 = vsyncpa [#allocation6], 1
    %98 = vsyncpa [#allocation4], 1

</llo_original>
